<compile_context>
chip_gen: v6e
topology: v6e:2x2x1
jax: 0.10.0
libtpu: 0.0.40
codegen_flags: <defaults>
</compile_context>

<pallas_src>
import jax
import jax.numpy as jnp
from jax.experimental import pallas as pl
from jax.experimental.pallas import tpu as pltpu


_LANES = 512          # lane-dense tile width (multiple of 128 -> unmasked vst)
_MAX_TILE_ROWS = 512  # 512x512 f32 = 1 MiB/tile; 3 arrays x 2 bufs ~= 6 MiB VMEM


def _cdiv(a, b):
    return -(-a // b)


def make_general_adaptive_nll(scale_init=0.5413, scale_lb=1e-05, aux_weight=1.0):
    """Returns a callable (x, scale) -> nll with all elementwise math in Pallas."""

    def kernel(x_ref, s_ref, o_ref):
        # Compute in f32 regardless of I/O dtype (bf16-safe: scale_lb and the
        # log chain lose precision in bf16); cast only on the final store.
        x = x_ref[...].astype(jnp.float32)
        z = s_ref[...].astype(jnp.float32) + scale_init
        # single-evaluation, numerically stable softplus: max(z,0)+log1p(exp(-|z|))
        sp = jnp.maximum(z, 0.0) + jnp.log1p(jnp.exp(-jnp.abs(z)))
        scale = sp + scale_lb
        inv_scale = pl.reciprocal(scale, approx=False)
        out = jnp.abs(x) * inv_scale + aux_weight * jnp.log(2.0 * scale)
        o_ref[...] = out.astype(o_ref.dtype)

    def forward(x, scale):
        b, c, h, w = x.shape
        assert c == 1, "GeneralAdaptiveNLL (PARAMS_PREDICTED) requires c == 1"
        total = b * h * w
        assert scale.size == total, (
            f"predicted scale has {scale.size} elements, expected {total} "
            f"(must view to ({b},1,{h},{w}))")

        # ---- flatten to a lane-dense 2D slab and pick the row tiling --------
        rows = _cdiv(total, _LANES)
        tile_rows = min(rows, _MAX_TILE_ROWS)        # full extent, or mult. of 8
        grid_rows = _cdiv(rows, tile_rows) * tile_rows
        padded = grid_rows * _LANES

        xf = x.reshape(-1)
        sf = scale.reshape(-1)                        # native dtype, no astype pass
        if padded != total:
            pad = padded - total
            xf = jnp.pad(xf, (0, pad))
            sf = jnp.pad(sf, (0, pad))
        x2 = xf.reshape(grid_rows, _LANES)
        s2 = sf.reshape(grid_rows, _LANES)

        spec = pl.BlockSpec((tile_rows, _LANES), lambda i: (i, 0))
        out2 = pl.pallas_call(
            kernel,
            out_shape=jax.ShapeDtypeStruct((grid_rows, _LANES), x.dtype),
            grid_spec=pltpu.PrefetchScalarGridSpec(
                num_scalar_prefetch=0,
                grid=(grid_rows // tile_rows,),
                in_specs=[spec, spec],
                out_specs=spec,
            ),
            compiler_params=pltpu.CompilerParams(
                dimension_semantics=("parallel",)),
        )(x2, s2)

        out = out2.reshape(-1)
        if padded != total:
            out = out[:total]
        return out.reshape(b, 1, h, w)

    return forward


def _reference(x, scale, scale_init=0.5413, scale_lb=1e-05, aux_weight=1.0):
    b, c, h, w = x.shape
    s = jax.nn.softplus(
        scale.reshape(b, 1, h, w).astype(jnp.float32) + scale_init) + scale_lb
    out = jnp.abs(x.astype(jnp.float32)) / s + aux_weight * jnp.log(2.0 * s)
    return out.astype(x.dtype)


if __name__ == "__main__":
    key = jax.random.PRNGKey(0)
    kx, ks, kx2, ks2 = jax.random.split(key, 4)

    loss_fn = make_general_adaptive_nll()

    # Small, lane-divisible case (total = 512 elements).
    B, C, H, W = 2, 1, 16, 16
    x = jax.random.normal(kx, (B, C, H, W), dtype=jnp.float32)
    scale = jax.random.normal(ks, (B, H, W), dtype=jnp.float32)  # raw predicted scale
    out = jax.block_until_ready(loss_fn(x, scale))
    ref = _reference(x, scale)
    assert out.shape == (B, 1, H, W)
    assert jnp.allclose(out, ref, atol=1e-5, rtol=1e-5)

    # Ragged case exercising the wrapper-pad tail path (total = 1200 elements).
    B2, H2, W2 = 3, 20, 20
    x2 = jax.random.normal(kx2, (B2, 1, H2, W2), dtype=jnp.float32)
    scale2 = jax.random.normal(ks2, (B2, H2, W2), dtype=jnp.float32)
    out2 = jax.block_until_ready(loss_fn(x2, scale2))
    ref2 = _reference(x2, scale2)
    assert out2.shape == (B2, 1, H2, W2)
    assert jnp.allclose(out2, ref2, atol=1e-5, rtol=1e-5)

    print("KERNEL_OK")
</pallas_src>

<mosaic_0001>
module attributes {stable_mosaic.version = 11 : i64} {
  func.func @kernel(%arg0: i32, %arg1: memref<1x512xf32, #tpu.memory_space<vmem>>, %arg2: memref<1x512xf32, #tpu.memory_space<vmem>>, %arg3: memref<1x512xf32, #tpu.memory_space<vmem>>) attributes {dimension_semantics = [#tpu.dimension_semantics<parallel>], iteration_bounds = array<i64: 1>, scalar_prefetch = 0 : i64, scratch_operands = 0 : i64, tpu.core_type = #tpu.core_type<tc>, window_params = [{transform_indices = @transform_0, window_bounds = array<i64: 1, 512>}, {transform_indices = @transform_1, window_bounds = array<i64: 1, 512>}, {transform_indices = @transform_2, window_bounds = array<i64: 1, 512>}]} {
    %c0 = arith.constant 0 : index
    %c0_0 = arith.constant 0 : index
    %0 = vector.load %arg1[%c0, %c0_0] : memref<1x512xf32, #tpu.memory_space<vmem>>, vector<1x512xf32>
    %c0_1 = arith.constant 0 : index
    %c0_2 = arith.constant 0 : index
    %1 = vector.load %arg2[%c0_1, %c0_2] : memref<1x512xf32, #tpu.memory_space<vmem>>, vector<1x512xf32>
    %cst = arith.constant 5.413000e-01 : f32
    %2 = vector.broadcast %cst : f32 to vector<1x512xf32>
    %3 = arith.addf %1, %2 : vector<1x512xf32>
    %cst_3 = arith.constant 0.000000e+00 : f32
    %4 = vector.broadcast %cst_3 : f32 to vector<1x512xf32>
    %5 = arith.maximumf %3, %4 : vector<1x512xf32>
    %6 = math.absf %3 : vector<1x512xf32>
    %cst_4 = arith.constant 0.000000e+00 : f32
    %7 = vector.broadcast %cst_4 : f32 to vector<1x512xf32>
    %8 = arith.subf %7, %6 : vector<1x512xf32>
    %9 = math.exp %8 : vector<1x512xf32>
    %10 = math.log1p %9 : vector<1x512xf32>
    %11 = arith.addf %5, %10 : vector<1x512xf32>
    %cst_5 = arith.constant 9.99999974E-6 : f32
    %12 = vector.broadcast %cst_5 : f32 to vector<1x512xf32>
    %13 = arith.addf %11, %12 : vector<1x512xf32>
    %14 = tpu.reciprocal %13 : vector<1x512xf32> -> vector<1x512xf32>
    %15 = math.absf %0 : vector<1x512xf32>
    %16 = arith.mulf %15, %14 : vector<1x512xf32>
    %cst_6 = arith.constant 2.000000e+00 : f32
    %17 = vector.broadcast %cst_6 : f32 to vector<1x512xf32>
    %18 = arith.mulf %17, %13 : vector<1x512xf32>
    %19 = math.log %18 : vector<1x512xf32>
    %cst_7 = arith.constant 1.000000e+00 : f32
    %20 = vector.broadcast %cst_7 : f32 to vector<1x512xf32>
    %21 = arith.mulf %20, %19 : vector<1x512xf32>
    %22 = arith.addf %16, %21 : vector<1x512xf32>
    %c0_8 = arith.constant 0 : index
    %c0_9 = arith.constant 0 : index
    %23 = vector.load %arg3[%c0_8, %c0_9] : memref<1x512xf32, #tpu.memory_space<vmem>>, vector<1x512xf32>
    tpu.vector_store %arg3[%c0_8, %c0_9], %22 {strides = array<i32>} : memref<1x512xf32, #tpu.memory_space<vmem>>, vector<1x512xf32>,
    return
  }
  func.func @transform_0(%arg0: i32) -> (i32, i32) {
    %c0_i32 = arith.constant 0 : i32
    %c0_i32_0 = arith.constant 0 : i32
    return %arg0, %c0_i32 : i32, i32
  }
  func.func @transform_1(%arg0: i32) -> (i32, i32) {
    %c0_i32 = arith.constant 0 : i32
    %c0_i32_0 = arith.constant 0 : i32
    return %arg0, %c0_i32 : i32, i32
  }
  func.func @transform_2(%arg0: i32) -> (i32, i32) {
    %c0_i32 = arith.constant 0 : i32
    %c0_i32_0 = arith.constant 0 : i32
    return %arg0, %c0_i32 : i32, i32
  }
}

</mosaic_0001>

<llo_original>
// kernel: tpu_custom_call.1
$region0: #{tpu_custom_call.1}
  #allocation0 [shape = 'u32[]', space=smem, size = 0x4, offset = 0x4, fixed_abs, tag = 'smem constant byte address 0x4 - core index']
  #allocation1 [shape = 'u32[144,128]{1,0:T(1,128)}', space=vmem, size = 0x12000, scoped, tag = 'internal scratch']
  %s0 = inlined_call_operand.hbm [shape: f32[1,512], index: 0, kind: input, shape index: {}]
  %s1 = inlined_call_operand.hbm [shape: f32[1,512], index: 1, kind: input, shape index: {}]
  %s2 = inlined_call_operand.hbm [shape: f32[1,512], index: 2, kind: output, shape index: {}]
  %s3 = sld [smem:[#allocation0]]
  $region26: #{tpu_custom_call.1} parent=0
    _
  %s5 = ssub.s32 1, %s3
  %s6 = scalar_select 0, %s5, %s3
  $region1: #{tpu_custom_call.1} parent=0
    #allocation2 [shape = 'u8[2048]{0}', space=vmem, size = 0x800, scoped, tag = 'input window, operand 0, single buffered']
    #allocation3 [shape = 's32[1]{0}', space=sflag, size = 0x4, scoped, tag = 'scoped memory for tpu_custom_call.1']
    #allocation4 [shape = 's32[1]{0}', space=sflag, size = 0x4, scoped, tag = 'scoped memory for tpu_custom_call.1']
    #allocation5 [shape = 'u8[2048]{0}', space=vmem, size = 0x800, scoped, tag = 'input window, operand 1, single buffered']
    #allocation6 [shape = 's32[1]{0}', space=sflag, size = 0x4, scoped, tag = 'scoped memory for tpu_custom_call.1']
    #allocation7 [shape = 'u8[2048]{0}', space=vmem, size = 0x800, scoped, tag = 'output window, operand 0, single buffered']
    %7 = vsyncpa [#allocation3], 0
    %8 = vsyncpa [#allocation6], 0
    %9 = vsyncpa [#allocation4], 0
    // Predicated region
    $region2: #{tpu_custom_call.1} parent=1 // pred_check
      _
    $region3: #{tpu_custom_call.1} parent=1 // pred_check_branch
      %11 = sbr.rel (0) target = $region5
    $region4: #{tpu_custom_call.1} parent=1 // pred_region
      %s13 = ssub.s32 64, 64
      %14 = vsyncadd [#allocation3], %s13
      %s16 = sshll.u32 [#allocation2], 4
      %s17 = int_to_ptr.vmem [resolvable:$true] %s16
      %19 = dma.hbm_to_vmem [thread:$0]  %s0, 64, %s17, [#allocation3]
    $region5: #{tpu_custom_call.1} parent=1 // pred_fallthru
      _
    // Predicated region
    $region6: #{tpu_custom_call.1} parent=1 // pred_check
      _
    $region7: #{tpu_custom_call.1} parent=1 // pred_check_branch
      %21 = sbr.rel (0) target = $region9
    $region8: #{tpu_custom_call.1} parent=1 // pred_region
      %s23 = ssub.s32 64, 64
      %24 = vsyncadd [#allocation6], %s23
      %s26 = sshll.u32 [#allocation5], 4
      %s27 = int_to_ptr.vmem [resolvable:$true] %s26
      %29 = dma.hbm_to_vmem [thread:$0]  %s1, 64, %s27, [#allocation6]
    $region9: #{tpu_custom_call.1} parent=1 // pred_fallthru
      _
    // Predicated region
    $region10: #{tpu_custom_call.1} parent=1 // pred_check
      _
    $region11: #{tpu_custom_call.1} parent=1 // pred_check_branch
      %31 = sbr.rel (0) target = $region13
    $region12: #{tpu_custom_call.1} parent=1 // pred_region
      %32 = dma.done [#allocation3], 64
    $region13: #{tpu_custom_call.1} parent=1 // pred_fallthru
      _
    // Predicated region
    $region14: #{tpu_custom_call.1} parent=1 // pred_check
      _
    $region15: #{tpu_custom_call.1} parent=1 // pred_check_branch
      %34 = sbr.rel (0) target = $region17
    $region16: #{tpu_custom_call.1} parent=1 // pred_region
      %35 = dma.done [#allocation6], 64
    $region17: #{tpu_custom_call.1} parent=1 // pred_fallthru
      _
    %v36 = vld [vmem:[#allocation2] sm:$0xf]
    %v37 = vld [vmem:[#allocation5] sm:$0xf]
    %v38 = vadd.f32 %v37, 0.5413
    %v39 = vmax.f32 %v38, 0.0
    %v40 = vand.u32 2147483647, %v38
    %v41 = vsub.f32 0.0, %v40
    %v42 = vmul.f32 %v41, 1.442695
    %v43 = vpow.pop %v42
    %v44 = vadd.f32 %v43, 1.0
    %v45 = vlog2.pop %v44
    %v46 = vmul.f32 %v45, 0.6931472
    %v47 = vmul.f32 -0.5, %v43
    %v48 = vadd.f32 %v47, 1.0
    %v49 = vmul.f32 %v48, %v43
    %v50 = vand.u32 2147483647, %v43
    %vm51 = vcmp.lt.f32.partialorder %v50, 0.0004427343
    %v52 = vsel %vm51, %v49, %v46
    %v53 = vadd.f32 %v39, %v52
    %v54 = vadd.f32 %v53, 1e-05
    %v55 = vrcp.pop %v54
    %v56 = vand.u32 2147483647, %v36
    %v57 = vmul.f32 %v56, %v55
    %v58 = vmul.f32 %v54, 2.0
    %v59 = vlog2.pop %v58
    %v60 = vmul.f32 %v59, 0.6931472
    %v61 = vadd.f32 %v57, %v60
    %v62 = vlaneseq
    %vm63 = vcmp.ge.s32.totalorder %v62, 0
    %vm64 = vcmp.lt.s32.totalorder %v62, 512
    %vm65 = vmand %vm63, %vm64
    %66 = vst.msk [vmem:[#allocation7] sm:$0xf] %vm65, %v61
    // Predicated region
    $region18: #{tpu_custom_call.1} parent=1 // pred_check
      _
    $region19: #{tpu_custom_call.1} parent=1 // pred_check_branch
      %68 = sbr.rel (0) target = $region21
    $region20: #{tpu_custom_call.1} parent=1 // pred_region
      %s70 = ssub.s32 64, 64
      %71 = vsyncadd [#allocation4], %s70
      %s73 = sshll.u32 [#allocation7], 4
      %s74 = int_to_ptr.vmem [resolvable:$true] %s73
      %76 = dma.vmem_to_hbm [thread:$0]  %s74, 64, %s2, [#allocation4]
    $region21: #{tpu_custom_call.1} parent=1 // pred_fallthru
      _
    // Predicated region
    $region22: #{tpu_custom_call.1} parent=1 // pred_check
      _
    $region23: #{tpu_custom_call.1} parent=1 // pred_check_branch
      %78 = sbr.rel (0) target = $region25
    $region24: #{tpu_custom_call.1} parent=1 // pred_region
      %79 = dma.done [#allocation4], 64
    $region25: #{tpu_custom_call.1} parent=1 // pred_fallthru
      _
    %80 = vsyncpa [#allocation3], 1
    %81 = vsyncpa [#allocation6], 1
    %82 = vsyncpa [#allocation4], 1

</llo_original>
